<compile_context>
chip_gen: v7x
topology: tpu7x:2x2x1
jax: 0.10.0
libtpu: 0.0.40
codegen_flags: <defaults>
</compile_context>

<pallas_src>
import jax
import jax.numpy as jnp
from jax.experimental import pallas as pl
from jax.experimental.pallas import tpu as pltpu

LANES = 512          # lane-dense last dim (multiple of 128)
MAX_TILE_ROWS = 256  # 256 x 512 f32 = 0.5 MiB per block -> fits v7x VMEM with ease


def shared_dropout_kernel(x_ref, m_ref, o_ref):
    """out = x * mask (pure elementwise, one tile per grid step)."""
    o_ref[...] = (x_ref[...] * m_ref[...]).astype(o_ref.dtype)


def shared_dropout(x, mask, *, training=True):
    """SharedDropout.forward.  Eval mode is an identity (no kernel launch)."""
    if not training:
        return x
    assert mask is not None, "SharedDropout: mask must be set via set_mask() in training"
    assert mask.shape == x.shape

    orig_shape = x.shape
    total = x.size

    # Flatten to a lane-dense 2-D view (rows, LANES); pad the tail with zeros
    # (harmless for an elementwise multiply, sliced off afterwards).
    xf = x.reshape(-1)
    mf = mask.reshape(-1).astype(x.dtype)

    rows_needed = -(-total // LANES)
    tm = min(MAX_TILE_ROWS, ((rows_needed + 7) // 8) * 8)   # multiple of 8 sublanes
    rows = ((rows_needed + tm - 1) // tm) * tm               # multiple of the row tile
    padded = rows * LANES
    if padded != total:
        xf = jnp.pad(xf, (0, padded - total))
        mf = jnp.pad(mf, (0, padded - total))
    x2 = xf.reshape(rows, LANES)
    m2 = mf.reshape(rows, LANES)

    tile_spec = pl.BlockSpec((tm, LANES), lambda i: (i, 0))
    itemsize = jnp.dtype(x.dtype).itemsize

    out = pl.pallas_call(
        shared_dropout_kernel,
        out_shape=jax.ShapeDtypeStruct((rows, LANES), x.dtype),
        grid=(rows // tm,),
        in_specs=[tile_spec, tile_spec],
        out_specs=tile_spec,
        compiler_params=pltpu.CompilerParams(
            dimension_semantics=("parallel",),
            vmem_limit_bytes=64 << 20,
        ),
        cost_estimate=pl.CostEstimate(
            flops=padded,
            transcendentals=0,
            bytes_accessed=3 * padded * itemsize,
        ),
    )(x2, m2)

    return out.reshape(-1)[:total].reshape(orig_shape)


if __name__ == "__main__":
    key = jax.random.PRNGKey(0)
    N, C = 64, 32                       # node features (num_nodes, channels)
    kx, km = jax.random.split(key)

    x = jax.random.normal(kx, (N, C), jnp.float32)

    # Training-mode shared mask (inverted-dropout style), as set via set_mask().
    p = 0.5
    mask = (jax.random.uniform(km, (N, C)) > p).astype(jnp.float32) / (1.0 - p)

    out = shared_dropout(x, mask, training=True)
    jax.block_until_ready(out)

    ref = x * mask
    assert out.shape == x.shape
    assert jnp.allclose(out, ref, atol=1e-6, rtol=1e-6)

    # Eval-mode path is identity, matching the reference.
    assert jnp.array_equal(shared_dropout(x, mask, training=False), x)

    print("KERNEL_OK")
</pallas_src>

<mosaic_0001>
module attributes {stable_mosaic.version = 11 : i64} {
  func.func @shared_dropout_kernel(%arg0: i32, %arg1: memref<8x512xf32, #tpu.memory_space<vmem>>, %arg2: memref<8x512xf32, #tpu.memory_space<vmem>>, %arg3: memref<8x512xf32, #tpu.memory_space<vmem>>) attributes {dimension_semantics = [#tpu.dimension_semantics<parallel>], iteration_bounds = array<i64: 1>, scalar_prefetch = 0 : i64, scratch_operands = 0 : i64, tpu.core_type = #tpu.core_type<tc>, window_params = [{transform_indices = @transform_0, window_bounds = array<i64: 8, 512>}, {transform_indices = @transform_1, window_bounds = array<i64: 8, 512>}, {transform_indices = @transform_2, window_bounds = array<i64: 8, 512>}]} {
    %c0 = arith.constant 0 : index
    %c0_0 = arith.constant 0 : index
    %0 = vector.load %arg1[%c0, %c0_0] : memref<8x512xf32, #tpu.memory_space<vmem>>, vector<8x512xf32>
    %c0_1 = arith.constant 0 : index
    %c0_2 = arith.constant 0 : index
    %1 = vector.load %arg2[%c0_1, %c0_2] : memref<8x512xf32, #tpu.memory_space<vmem>>, vector<8x512xf32>
    %2 = arith.mulf %0, %1 : vector<8x512xf32>
    %c0_3 = arith.constant 0 : index
    %c0_4 = arith.constant 0 : index
    %3 = vector.load %arg3[%c0_3, %c0_4] : memref<8x512xf32, #tpu.memory_space<vmem>>, vector<8x512xf32>
    tpu.vector_store %arg3[%c0_3, %c0_4], %2 {strides = array<i32>} : memref<8x512xf32, #tpu.memory_space<vmem>>, vector<8x512xf32>,
    return
  }
  func.func @transform_0(%arg0: i32) -> (i32, i32) {
    %c0_i32 = arith.constant 0 : i32
    %c0_i32_0 = arith.constant 0 : i32
    return %arg0, %c0_i32 : i32, i32
  }
  func.func @transform_1(%arg0: i32) -> (i32, i32) {
    %c0_i32 = arith.constant 0 : i32
    %c0_i32_0 = arith.constant 0 : i32
    return %arg0, %c0_i32 : i32, i32
  }
  func.func @transform_2(%arg0: i32) -> (i32, i32) {
    %c0_i32 = arith.constant 0 : i32
    %c0_i32_0 = arith.constant 0 : i32
    return %arg0, %c0_i32 : i32, i32
  }
}

</mosaic_0001>

<llo_original>
// kernel: tpu_custom_call.1
$region0: #{tpu_custom_call.1}
  #allocation0 [shape = 'u32[]', space=smem, size = 0x4, offset = 0x4, fixed_abs, tag = 'smem constant byte address 0x4 - core index']
  #allocation1 [shape = 'u32[144,128]{1,0:T(1,128)}', space=vmem, size = 0x12000, scoped, tag = 'internal scratch']
  %s0 = inlined_call_operand.hbm [shape: f32[8,512], index: 0, kind: input, shape index: {}]
  %s1 = inlined_call_operand.hbm [shape: f32[8,512], index: 1, kind: input, shape index: {}]
  %s2 = inlined_call_operand.hbm [shape: f32[8,512], index: 2, kind: output, shape index: {}]
  %s3 = sld [smem:[#allocation0]]
  $region26: #{tpu_custom_call.1} parent=0
    _
  %s5 = ssub.s32 1, %s3
  %s6 = scalar_select 0, %s5, %s3
  $region1: #{tpu_custom_call.1} parent=0
    #allocation2 [shape = 'u8[16384]{0}', space=vmem, size = 0x4000, scoped, tag = 'input window, operand 0, single buffered']
    #allocation3 [shape = 's32[1]{0}', space=sflag, size = 0x4, scoped, tag = 'scoped memory for tpu_custom_call.1']
    #allocation4 [shape = 's32[1]{0}', space=sflag, size = 0x4, scoped, tag = 'scoped memory for tpu_custom_call.1']
    #allocation5 [shape = 'u8[16384]{0}', space=vmem, size = 0x4000, scoped, tag = 'input window, operand 1, single buffered']
    #allocation6 [shape = 's32[1]{0}', space=sflag, size = 0x4, scoped, tag = 'scoped memory for tpu_custom_call.1']
    #allocation7 [shape = 'u8[16384]{0}', space=vmem, size = 0x4000, scoped, tag = 'output window, operand 0, single buffered']
    %7 = vsyncpa [#allocation3], 0
    %8 = vsyncpa [#allocation6], 0
    %9 = vsyncpa [#allocation4], 0
    // Predicated region
    $region2: #{tpu_custom_call.1} parent=1 // pred_check
      _
    $region3: #{tpu_custom_call.1} parent=1 // pred_check_branch
      %11 = sbr.rel (0) target = $region5
    $region4: #{tpu_custom_call.1} parent=1 // pred_region
      %s13 = ssub.s32 512, 512
      %14 = vsyncadd [#allocation3], %s13
      %s16 = sshll.u32 [#allocation2], 4
      %s17 = int_to_ptr.vmem [resolvable:$true] %s16
      %19 = dma.hbm_to_vmem [thread:$0]  %s0, 512, %s17, [#allocation3]
    $region5: #{tpu_custom_call.1} parent=1 // pred_fallthru
      _
    // Predicated region
    $region6: #{tpu_custom_call.1} parent=1 // pred_check
      _
    $region7: #{tpu_custom_call.1} parent=1 // pred_check_branch
      %21 = sbr.rel (0) target = $region9
    $region8: #{tpu_custom_call.1} parent=1 // pred_region
      %s23 = ssub.s32 512, 512
      %24 = vsyncadd [#allocation6], %s23
      %s26 = sshll.u32 [#allocation5], 4
      %s27 = int_to_ptr.vmem [resolvable:$true] %s26
      %29 = dma.hbm_to_vmem [thread:$0]  %s1, 512, %s27, [#allocation6]
    $region9: #{tpu_custom_call.1} parent=1 // pred_fallthru
      _
    // Predicated region
    $region10: #{tpu_custom_call.1} parent=1 // pred_check
      _
    $region11: #{tpu_custom_call.1} parent=1 // pred_check_branch
      %31 = sbr.rel (0) target = $region13
    $region12: #{tpu_custom_call.1} parent=1 // pred_region
      %32 = dma.done [#allocation3], 512
    $region13: #{tpu_custom_call.1} parent=1 // pred_fallthru
      _
    // Predicated region
    $region14: #{tpu_custom_call.1} parent=1 // pred_check
      _
    $region15: #{tpu_custom_call.1} parent=1 // pred_check_branch
      %34 = sbr.rel (0) target = $region17
    $region16: #{tpu_custom_call.1} parent=1 // pred_region
      %35 = dma.done [#allocation6], 512
    $region17: #{tpu_custom_call.1} parent=1 // pred_fallthru
      _
    %v36 = vld [vmem:[#allocation2] sm:$0xff]
    %v37 = vld [vmem:[#allocation2 + $0x8] sm:$0xff]
    %v38 = vld [vmem:[#allocation2 + $0x10] sm:$0xff]
    %v39 = vld [vmem:[#allocation2 + $0x18] sm:$0xff]
    %v40 = vld [vmem:[#allocation5] sm:$0xff]
    %v41 = vld [vmem:[#allocation5 + $0x8] sm:$0xff]
    %v42 = vld [vmem:[#allocation5 + $0x10] sm:$0xff]
    %v43 = vld [vmem:[#allocation5 + $0x18] sm:$0xff]
    %v44 = vmul.f32 %v36, %v40
    %v45 = vmul.f32 %v37, %v41
    %v46 = vmul.f32 %v38, %v42
    %v47 = vmul.f32 %v39, %v43
    %48 = vst [vmem:[#allocation7] sm:$0xff] %v44
    %49 = vst [vmem:[#allocation7 + $0x8] sm:$0xff] %v45
    %50 = vst [vmem:[#allocation7 + $0x10] sm:$0xff] %v46
    %51 = vst [vmem:[#allocation7 + $0x18] sm:$0xff] %v47
    // Predicated region
    $region18: #{tpu_custom_call.1} parent=1 // pred_check
      _
    $region19: #{tpu_custom_call.1} parent=1 // pred_check_branch
      %53 = sbr.rel (0) target = $region21
    $region20: #{tpu_custom_call.1} parent=1 // pred_region
      %s55 = ssub.s32 512, 512
      %56 = vsyncadd [#allocation4], %s55
      %s58 = sshll.u32 [#allocation7], 4
      %s59 = int_to_ptr.vmem [resolvable:$true] %s58
      %61 = dma.vmem_to_hbm [thread:$0]  %s59, 512, %s2, [#allocation4]
    $region21: #{tpu_custom_call.1} parent=1 // pred_fallthru
      _
    // Predicated region
    $region22: #{tpu_custom_call.1} parent=1 // pred_check
      _
    $region23: #{tpu_custom_call.1} parent=1 // pred_check_branch
      %63 = sbr.rel (0) target = $region25
    $region24: #{tpu_custom_call.1} parent=1 // pred_region
      %64 = dma.done [#allocation4], 512
    $region25: #{tpu_custom_call.1} parent=1 // pred_fallthru
      _
    %65 = vsyncpa [#allocation3], 1
    %66 = vsyncpa [#allocation6], 1
    %67 = vsyncpa [#allocation4], 1

</llo_original>
